<compile_context>
chip_gen: v6e
topology: v6e:2x2x1
jax: 0.10.0
libtpu: 0.0.40
codegen_flags: <defaults>
</compile_context>

<pallas_src>
import jax
import jax.numpy as jnp
from jax.experimental import pallas as pl
from jax.experimental.pallas import tpu as pltpu


def _folded_head_kernel(x_ref, w_ref, b_ref, o_ref):
    # Single affine map: out = x @ W_fold + b_fold
    # (dense -> dropout(p=0, identity) -> out_proj folded at init time).
    x = x_ref[...].astype(w_ref.dtype)          # no-op when dtypes already match
    acc = jnp.dot(x, w_ref[...], preferred_element_type=jnp.float32)
    o_ref[...] = (acc + b_ref[...]).astype(o_ref.dtype)   # f32 bias add, then cast


def prepare_params(w1, b1, w2, b2, *, param_dtype=None):
    """One-time (init-time) conversion from PyTorch nn.Linear layout + folding.

    nn.Linear stores W as (out_features, in_features) and computes x @ W.T + b.
    Because the module applies no nonlinearity and dropout(p=0.0) is identity,
    the two Linears fold exactly into one affine map, computed here in f32:
        W_fold = W1.T @ W2.T        (input, output)
        b_fold = b1 @ W2.T + b2     (1, output)     -- kept 2-D for TPU layout
    Optionally store W_fold in bf16 (native MXU rate, halves weight bytes);
    the bias stays f32 since it is added after the f32 accumulation.
    """
    # TODO(synk): if dropout p > 0 is ever required, folding is invalid -- keep
    # two matmuls and insert a pltpu.prng_random_bits-based dropout mask between them.
    w1 = jnp.asarray(w1, jnp.float32)
    b1 = jnp.asarray(b1, jnp.float32)
    w2 = jnp.asarray(w2, jnp.float32)
    b2 = jnp.asarray(b2, jnp.float32)
    w_fold = w1.T @ w2.T                              # (input, output)
    b_fold = (b1 @ w2.T + b2).reshape(1, -1)          # (1, output), f32
    if param_dtype is not None:
        w_fold = w_fold.astype(param_dtype)
    return w_fold, b_fold


# Leave generous headroom under the 32 MiB scoped-VMEM default (v7x physical is
# 64 MiB/TC; v5e/v6e have 128 MiB so this is conservative everywhere).
_VMEM_BUDGET_BYTES = 24 * 1024 * 1024


def classification_head(x, params, *, batch_tile=1024, vmem_budget_bytes=None):
    """Forward pass. `params` must be the result of prepare_params (done once)."""
    w_fold, b_fold = params
    B, in_size = x.shape
    out_size = w_fold.shape[1]
    budget = _VMEM_BUDGET_BYTES if vmem_budget_bytes is None else vmem_budget_bytes

    itemsize = x.dtype.itemsize
    resident_bytes = (w_fold.size * w_fold.dtype.itemsize
                      + b_fold.size * b_fold.dtype.itemsize)

    def tile_bytes(rows):
        # one x tile + one out tile of `rows` rows
        return rows * in_size * itemsize + rows * out_size * itemsize

    flops = 2 * B * in_size * out_size
    bytes_accessed = (B * in_size * itemsize + B * out_size * itemsize
                      + resident_bytes)
    cost = pl.CostEstimate(flops=flops, transcendentals=0,
                           bytes_accessed=bytes_accessed)

    # ---------- small-batch path: one VMEM tile, no grid / pipeline machinery ----------
    if B <= batch_tile and tile_bytes(B) + resident_bytes <= budget:
        return pl.pallas_call(
            _folded_head_kernel,
            out_shape=jax.ShapeDtypeStruct((B, out_size), x.dtype),
            in_specs=[
                pl.BlockSpec(memory_space=pltpu.MemorySpace.VMEM),
                pl.BlockSpec(memory_space=pltpu.MemorySpace.VMEM),
                pl.BlockSpec(memory_space=pltpu.MemorySpace.VMEM),
            ],
            out_specs=pl.BlockSpec(memory_space=pltpu.MemorySpace.VMEM),
            cost_estimate=cost,
        )(x, w_fold, b_fold)

    # ---------- large-batch path: tile over the batch axis only ----------
    # Folded weight + bias are tiny and stay VMEM-resident (constant (0,0)
    # index_map).  Clamp batch_tile so double-buffered (x + out) tiles plus the
    # resident params stay under the scoped-VMEM budget (v7x: 64 MiB/TC).
    bt = max(8, (min(batch_tile, B) // 8) * 8)
    while bt > 8 and 2 * tile_bytes(bt) + 2 * resident_bytes > budget:
        bt //= 2
    bt = max(8, (bt // 8) * 8)

    vmem_limit = min(48 * 1024 * 1024,
                     2 * tile_bytes(bt) + 2 * resident_bytes + (8 << 20))

    grid = (pl.cdiv(B, bt),)
    return pl.pallas_call(
        _folded_head_kernel,
        out_shape=jax.ShapeDtypeStruct((B, out_size), x.dtype),
        grid=grid,
        in_specs=[
            pl.BlockSpec((bt, in_size), lambda i: (i, 0)),
            pl.BlockSpec((in_size, out_size), lambda i: (0, 0)),
            pl.BlockSpec((1, out_size), lambda i: (0, 0)),
        ],
        out_specs=pl.BlockSpec((bt, out_size), lambda i: (i, 0)),
        compiler_params=pltpu.CompilerParams(
            # No-op on single-TC v5e/v6e; lets v7x shard the batch axis across
            # its two TensorCores when the grid has >=2 tiles per core.
            dimension_semantics=("parallel",),
            vmem_limit_bytes=vmem_limit,
        ),
        cost_estimate=cost,
    )(x, w_fold, b_fold)


if __name__ == "__main__":
    # Small shapes consistent with the module (scaled down): input=hidden=32, out=2.
    B, INPUT, HIDDEN, OUT = 8, 32, 32, 2

    key = jax.random.PRNGKey(0)
    kx, kw1, kb1, kw2, kb2, kx2 = jax.random.split(key, 6)

    x = jax.random.normal(kx, (B, INPUT), dtype=jnp.float32)
    # PyTorch Linear parameter shapes: (out_features, in_features) / (out_features,).
    w1 = jax.random.normal(kw1, (HIDDEN, INPUT), dtype=jnp.float32) * 0.05
    b1 = jax.random.normal(kb1, (HIDDEN,), dtype=jnp.float32) * 0.05
    w2 = jax.random.normal(kw2, (OUT, HIDDEN), dtype=jnp.float32) * 0.05
    b2 = jax.random.normal(kb2, (OUT,), dtype=jnp.float32) * 0.05

    def ref_fn(xx):
        return (xx @ w1.T + b1) @ w2.T + b2

    # One-time parameter layout prep + affine folding (outside the hot path).
    params_f32 = prepare_params(w1, b1, w2, b2)
    params_bf16 = prepare_params(w1, b1, w2, b2, param_dtype=jnp.bfloat16)

    # --- small-batch (grid-free, VMEM-resident) path, f32 params ---
    out = classification_head(x, params_f32)
    jax.block_until_ready(out)
    assert out.shape == (B, OUT)
    assert jnp.allclose(out, ref_fn(x), atol=1e-4, rtol=1e-4), "small-path mismatch"

    # --- small-batch path, bf16 folded weight (f32 accumulation + f32 bias) ---
    out_bf16 = classification_head(x, params_bf16)
    jax.block_until_ready(out_bf16)
    assert jnp.allclose(out_bf16, ref_fn(x), atol=3e-2, rtol=3e-2), "bf16-path mismatch"

    # --- batch-tiled path (resident folded weight, parallel batch axis),
    #     deliberately ragged B to exercise last-tile masking ---
    B_BIG = 2000
    x_big = jax.random.normal(kx2, (B_BIG, INPUT), dtype=jnp.float32)
    out_big = classification_head(x_big, params_f32, batch_tile=1024)
    jax.block_until_ready(out_big)
    assert out_big.shape == (B_BIG, OUT)
    assert jnp.allclose(out_big, ref_fn(x_big), atol=1e-4, rtol=1e-4), "tiled-path mismatch"

    print("KERNEL_OK")
</pallas_src>

<mosaic_0001>
module attributes {stable_mosaic.version = 11 : i64} {
  func.func @_folded_head_kernel(%arg0: memref<8x32xf32, #tpu.memory_space<vmem>>, %arg1: memref<32x2xf32, #tpu.memory_space<vmem>>, %arg2: memref<1x2xf32, #tpu.memory_space<vmem>>, %arg3: memref<8x2xf32, #tpu.memory_space<vmem>>) attributes {dimension_semantics = [], scalar_prefetch = 0 : i64, scratch_operands = 0 : i64, tpu.core_type = #tpu.core_type<tc>} {
    %c0 = arith.constant 0 : index
    %c0_0 = arith.constant 0 : index
    %0 = vector.load %arg0[%c0, %c0_0] : memref<8x32xf32, #tpu.memory_space<vmem>>, vector<8x32xf32>
    %c0_1 = arith.constant 0 : index
    %c0_2 = arith.constant 0 : index
    %1 = vector.load %arg1[%c0_1, %c0_2] : memref<32x2xf32, #tpu.memory_space<vmem>>, vector<32x2xf32>
    %cst = arith.constant dense<0.000000e+00> : vector<8x2xf32>
    %2 = tpu.matmul %0, %1, %cst {dimension_numbers = #tpu.dot_dimension_numbers<[1], [0], [0], [1], [0, 0, 1, 1], [], []>} : vector<8x32xf32>, vector<32x2xf32>, vector<8x2xf32> -> vector<8x2xf32>
    %c0_3 = arith.constant 0 : index
    %c0_4 = arith.constant 0 : index
    %3 = vector.load %arg2[%c0_3, %c0_4] : memref<1x2xf32, #tpu.memory_space<vmem>>, vector<1x2xf32>
    %4 = vector.broadcast %3 : vector<1x2xf32> to vector<8x2xf32>
    %5 = arith.addf %2, %4 : vector<8x2xf32>
    %c0_5 = arith.constant 0 : index
    %c0_6 = arith.constant 0 : index
    %6 = vector.load %arg3[%c0_5, %c0_6] : memref<8x2xf32, #tpu.memory_space<vmem>>, vector<8x2xf32>
    tpu.vector_store %arg3[%c0_5, %c0_6], %5 {strides = array<i32>} : memref<8x2xf32, #tpu.memory_space<vmem>>, vector<8x2xf32>,
    return
  }
}

</mosaic_0001>

<llo_original>
// kernel: tpu_custom_call.1
$region0: #{tpu_custom_call.1}
  #allocation0 [shape = 'u32[]', space=smem, size = 0x4, offset = 0x4, fixed_abs, tag = 'smem constant byte address 0x4 - core index']
  #allocation1 [shape = 'u32[144,128]{1,0:T(1,128)}', space=vmem, size = 0x12000, scoped, tag = 'internal scratch']
  %s0 = inlined_call_operand.vmem [shape: f32[8,32], index: 0, kind: input, shape index: {}]
  %s1 = inlined_call_operand.vmem [shape: f32[32,2], index: 1, kind: input, shape index: {}]
  %s2 = inlined_call_operand.vmem [shape: f32[1,2], index: 2, kind: input, shape index: {}]
  %s3 = inlined_call_operand.vmem [shape: f32[8,2], index: 3, kind: output, shape index: {}]
  %s4 = sld [smem:[#allocation0]]
  $region22: #{tpu_custom_call.1} parent=0
    _
  %s6 = ssub.s32 1, %s4
  %s7 = scalar_select 0, %s6, %s4
  // Predicated region
  $region2: #{tpu_custom_call.1} parent=0 // pred_check
    _
  $region3: #{tpu_custom_call.1} parent=0 // pred_check_branch
    %9 = sbr.rel (0) target = $region5
  $region4: #{tpu_custom_call.1} parent=0 // pred_region
    _
  $region5: #{tpu_custom_call.1} parent=0 // pred_fallthru
    _
  // Predicated region
  $region6: #{tpu_custom_call.1} parent=0 // pred_check
    _
  $region7: #{tpu_custom_call.1} parent=0 // pred_check_branch
    %11 = sbr.rel (0) target = $region9
  $region8: #{tpu_custom_call.1} parent=0 // pred_region
    _
  $region9: #{tpu_custom_call.1} parent=0 // pred_fallthru
    _
  // Predicated region
  $region10: #{tpu_custom_call.1} parent=0 // pred_check
    _
  $region11: #{tpu_custom_call.1} parent=0 // pred_check_branch
    %13 = sbr.rel (0) target = $region13
  $region12: #{tpu_custom_call.1} parent=0 // pred_region
    _
  $region13: #{tpu_custom_call.1} parent=0 // pred_fallthru
    _
  %v14 = vld [vmem:[%s0] sm:$0xff]
  %v15 = vld [vmem:[%s1] sm:$0xff]
  %v16 = vld [vmem:[%s1 + $0x8] sm:$0xff]
  %v17 = vld [vmem:[%s1 + $0x10] sm:$0xff]
  %v18 = vld [vmem:[%s1 + $0x18] sm:$0xff]
  %v19 = vld [vmem:[%s2] sm:$0x1]
  %v21 = vlaneseq
  %v22 = vshrl.u32 %v21, 7
  %v23 = vsub.s32 0, %v22
  %v24 = vrot.slane %v19, %v23
  %vm26 = vcmask 261120
  %v28 = vsel %vm26, %v14, 0
  %30 = vmatprep.subr.mxu0 0.0
  %31 = vmatpush1.msra.mxu0 0.0
  %32 = vmatprep.subr.mxu0 0.0
  %33 = vmatpush1.msra.mxu0 0.0
  %34 = vmatprep.subr.mxu0 0.0
  %35 = vmatpush1.msra.mxu0 0.0
  %36 = vmatprep.subr.mxu0 0.0
  %37 = vmatpush1.msra.mxu0 0.0
  %38 = vmatprep.subr.mxu0 0.0
  %39 = vmatpush1.msra.mxu0 0.0
  %40 = vmatprep.subr.mxu0 0.0
  %41 = vmatpush1.msra.mxu0 0.0
  %42 = vmatprep.subr.mxu0 0.0
  %43 = vmatpush1.msra.mxu0 0.0
  %44 = vmatprep.subr.mxu0 0.0
  %45 = vmatpush1.msra.mxu0 0.0
  %46 = vmatprep.subr.mxu0 0.0
  %47 = vmatpush1.msra.mxu0 0.0
  %48 = vmatprep.subr.mxu0 0.0
  %49 = vmatpush1.msra.mxu0 0.0
  %50 = vmatprep.subr.mxu0 0.0
  %51 = vmatpush1.msra.mxu0 0.0
  %52 = vmatprep.subr.mxu0 0.0
  %53 = vmatpush1.msra.mxu0 0.0
  %54 = vmatprep.subr.mxu0 0.0
  %55 = vmatpush1.msra.mxu0 %v18
  %56 = vmatprep.subr.mxu0 0.0
  %57 = vmatpush1.msra.mxu0 %v17
  %58 = vmatprep.subr.mxu0 0.0
  %59 = vmatpush1.msra.mxu0 %v16
  %60 = vmatprep.subr.mxu0 0.0
  %61 = vmatpush1.msra.mxu0 %v15
  %62 = vmatprep.subr.mxu0 0.0
  %63 = vmatpush2.msra.mxu0 0.0
  %64 = vmatprep.subr.mxu0 0.0
  %65 = vmatpush2.msra.mxu0 0.0
  %66 = vmatprep.subr.mxu0 0.0
  %67 = vmatpush2.msra.mxu0 0.0
  %68 = vmatprep.subr.mxu0 0.0
  %69 = vmatpush2.msra.mxu0 0.0
  %70 = vmatprep.subr.mxu0 0.0
  %71 = vmatpush2.msra.mxu0 0.0
  %72 = vmatprep.subr.mxu0 0.0
  %73 = vmatpush2.msra.mxu0 0.0
  %74 = vmatprep.subr.mxu0 0.0
  %75 = vmatpush2.msra.mxu0 0.0
  %76 = vmatprep.subr.mxu0 0.0
  %77 = vmatpush2.msra.mxu0 0.0
  %78 = vmatprep.subr.mxu0 0.0
  %79 = vmatpush2.msra.mxu0 0.0
  %80 = vmatprep.subr.mxu0 0.0
  %81 = vmatpush2.msra.mxu0 0.0
  %82 = vmatprep.subr.mxu0 0.0
  %83 = vmatpush2.msra.mxu0 0.0
  %84 = vmatprep.subr.mxu0 0.0
  %85 = vmatpush2.msra.mxu0 0.0
  %86 = vmatprep.subr.mxu0 0.0
  %87 = vmatpush2.msra.mxu0 0.0
  %88 = vmatprep.subr.mxu0 0.0
  %89 = vmatpush2.msra.mxu0 0.0
  %90 = vmatprep.subr.mxu0 0.0
  %91 = vmatpush2.msra.mxu0 0.0
  %92 = vmatprep.subr.mxu0 0.0
  %93 = vmatpush2.msra.mxu0 0.0
  %94 = vmatprep.mubr.f32.mxu0 0.0
  %95 = vmatmul.mubr.f32.gmra.mxu0 %v28
  %v96 = vpop.f32.mrf.mxu0
  %v97 = vadd.f32 %v24, %v96
  %v98 = vpop.f32.mrf.mxu0
  %99 = vdwg.mxu0
  %vm100 = vcmask 15360
  %101 = vst.msk [vmem:[%s3] sm:$0xff] %vm100, %v97
  // Predicated region
  $region14: #{tpu_custom_call.1} parent=0 // pred_check
    _
  $region15: #{tpu_custom_call.1} parent=0 // pred_check_branch
    %103 = sbr.rel (0) target = $region17
  $region16: #{tpu_custom_call.1} parent=0 // pred_region
    _
  $region17: #{tpu_custom_call.1} parent=0 // pred_fallthru
    _
  // Predicated region
  $region18: #{tpu_custom_call.1} parent=0 // pred_check
    _
  $region19: #{tpu_custom_call.1} parent=0 // pred_check_branch
    %105 = sbr.rel (0) target = $region21
  $region20: #{tpu_custom_call.1} parent=0 // pred_region
    _
  $region21: #{tpu_custom_call.1} parent=0 // pred_fallthru
    _

</llo_original>
